<compile_context>
chip_gen: v7x
topology: tpu7x:2x2x1
jax: 0.10.0
libtpu: 0.0.40
codegen_flags: <defaults>
</compile_context>

<pallas_src>
import jax
import jax.numpy as jnp
from jax.experimental import pallas as pl
from jax.experimental.pallas import tpu as pltpu


def _round_up(x, n):
    return ((x + n - 1) // n) * n


def mlp_kernel(x_ref, w1_ref, b1_ref, w2_ref, b2_ref, w3_ref, b3_ref,
               pred_ref, feat_ref):
    # encoder layer 1: Linear(m, hidden) + ReLU  (bf16 matmul, f32 accumulate)
    x = x_ref[...].astype(jnp.bfloat16)
    h1 = jnp.dot(x, w1_ref[...], preferred_element_type=jnp.float32)
    h1 = jnp.maximum(h1 + b1_ref[...], 0.0)
    # encoder layer 2: Linear(hidden, hidden) + ReLU
    h2 = jnp.dot(h1.astype(jnp.bfloat16), w2_ref[...],
                 preferred_element_type=jnp.float32)
    h2 = jnp.maximum(h2 + b2_ref[...], 0.0)
    feat_ref[...] = h2.astype(feat_ref.dtype)
    # regression head: Linear(hidden, 3)
    p = jnp.dot(h2.astype(jnp.bfloat16), w3_ref[...],
                preferred_element_type=jnp.float32)
    pred_ref[...] = (p + b3_ref[...]).astype(pred_ref.dtype)


def mlp_forward(x, params, *, tile_b=512):
    """x: [B, m] float32. params: dict of f32 weights/biases.

    Returns (pred [B,3], features [B,hidden]) exactly like MLP.forward.
    """
    w1, b1, w2, b2, w3, b3 = (params["w1"], params["b1"], params["w2"],
                              params["b2"], params["w3"], params["b3"])
    B, m = x.shape
    hidden = w1.shape[1]
    out_dim = w3.shape[1]

    # Pad the hidden dim to a full 128-lane width (zero pad is mathematically
    # inert) and cast matmul weights to bf16 once; biases stay f32.
    hp = _round_up(hidden, 128)
    dh = hp - hidden
    w1p = jnp.pad(w1, ((0, 0), (0, dh))).astype(jnp.bfloat16)
    b1p = jnp.pad(b1, ((0, 0), (0, dh)))
    w2p = jnp.pad(w2, ((0, dh), (0, dh))).astype(jnp.bfloat16)
    b2p = jnp.pad(b2, ((0, 0), (0, dh)))
    w3p = jnp.pad(w3, ((0, dh), (0, 0))).astype(jnp.bfloat16)
    b3p = b3

    # Batch tiling: up to `tile_b` rows per grid step (multiple of 8).
    tb = min(tile_b, _round_up(B, 8))
    grid = (pl.cdiv(B, tb),)

    batch_spec = lambda d: pl.BlockSpec((tb, d), lambda i: (i, 0))
    resident = lambda a: pl.BlockSpec(a.shape, lambda i: (0, 0))

    pred, feat_padded = pl.pallas_call(
        mlp_kernel,
        grid=grid,
        out_shape=(
            jax.ShapeDtypeStruct((B, out_dim), jnp.float32),
            jax.ShapeDtypeStruct((B, hp), jnp.float32),
        ),
        in_specs=[
            batch_spec(m),
            resident(w1p), resident(b1p),
            resident(w2p), resident(b2p),
            resident(w3p), resident(b3p),
        ],
        out_specs=(
            batch_spec(out_dim),
            batch_spec(hp),
        ),
        compiler_params=pltpu.CompilerParams(
            dimension_semantics=("parallel",)),
    )(x, w1p, b1p, w2p, b2p, w3p, b3p)

    # Drop the zero-padded hidden columns before returning to callers.
    return pred, feat_padded[:, :hidden]


def init_params(key, m=100, hidden=100, out_dim=3):
    """Matches MLP.init_weights(): Linear weights ~ N(0, 0.001^2), biases = 0."""
    k1, k2, k3 = jax.random.split(key, 3)
    std = 0.001
    return {
        "w1": jax.random.normal(k1, (m, hidden), jnp.float32) * std,
        "b1": jnp.zeros((1, hidden), jnp.float32),
        "w2": jax.random.normal(k2, (hidden, hidden), jnp.float32) * std,
        "b2": jnp.zeros((1, hidden), jnp.float32),
        "w3": jax.random.normal(k3, (hidden, out_dim), jnp.float32) * std,
        "b3": jnp.zeros((1, out_dim), jnp.float32),
    }


def mlp_reference(x, params):
    h1 = jnp.maximum(x @ params["w1"] + params["b1"], 0.0)
    h2 = jnp.maximum(h1 @ params["w2"] + params["b2"], 0.0)
    pred = h2 @ params["w3"] + params["b3"]
    return pred, h2


if __name__ == "__main__":
    key = jax.random.PRNGKey(0)
    k_params, k_x = jax.random.split(key)

    B, m = 8, 100  # small demo batch; module implies m=100 input features
    params = init_params(k_params, m=m, hidden=100, out_dim=3)
    x = jax.random.normal(k_x, (B, m), jnp.float32)

    pred, feats = mlp_forward(x, params)
    jax.block_until_ready((pred, feats))

    # correctness check against pure-f32 JAX reference (bf16 matmul operands
    # with f32 accumulation -> loosened relative tolerance)
    pred_ref, feats_ref = mlp_reference(x, params)
    assert pred.shape == (B, 3) and feats.shape == (B, 100)
    assert jnp.allclose(pred, pred_ref, rtol=2e-2, atol=1e-5)
    assert jnp.allclose(feats, feats_ref, rtol=2e-2, atol=1e-5)

    print("KERNEL_OK")
</pallas_src>

<mosaic_0001>
module attributes {stable_mosaic.version = 11 : i64} {
  func.func @mlp_kernel(%arg0: i32, %arg1: memref<8x100xf32, #tpu.memory_space<vmem>>, %arg2: memref<100x128xbf16, #tpu.memory_space<vmem>>, %arg3: memref<1x128xf32, #tpu.memory_space<vmem>>, %arg4: memref<128x128xbf16, #tpu.memory_space<vmem>>, %arg5: memref<1x128xf32, #tpu.memory_space<vmem>>, %arg6: memref<128x3xbf16, #tpu.memory_space<vmem>>, %arg7: memref<1x3xf32, #tpu.memory_space<vmem>>, %arg8: memref<8x3xf32, #tpu.memory_space<vmem>>, %arg9: memref<8x128xf32, #tpu.memory_space<vmem>>) attributes {dimension_semantics = [#tpu.dimension_semantics<parallel>], iteration_bounds = array<i64: 1>, scalar_prefetch = 0 : i64, scratch_operands = 0 : i64, tpu.core_type = #tpu.core_type<tc>, window_params = [{transform_indices = @transform_0, window_bounds = array<i64: 8, 100>}, {pipeline_mode = #tpu.pipeline_mode<synchronous>, transform_indices = @transform_1, window_bounds = array<i64: 100, 128>}, {pipeline_mode = #tpu.pipeline_mode<synchronous>, transform_indices = @transform_2, window_bounds = array<i64: 1, 128>}, {pipeline_mode = #tpu.pipeline_mode<synchronous>, transform_indices = @transform_3, window_bounds = array<i64: 128, 128>}, {pipeline_mode = #tpu.pipeline_mode<synchronous>, transform_indices = @transform_4, window_bounds = array<i64: 1, 128>}, {pipeline_mode = #tpu.pipeline_mode<synchronous>, transform_indices = @transform_5, window_bounds = array<i64: 128, 3>}, {pipeline_mode = #tpu.pipeline_mode<synchronous>, transform_indices = @transform_6, window_bounds = array<i64: 1, 3>}, {transform_indices = @transform_7, window_bounds = array<i64: 8, 3>}, {transform_indices = @transform_8, window_bounds = array<i64: 8, 128>}]} {
    %c0 = arith.constant 0 : index
    %c0_0 = arith.constant 0 : index
    %0 = vector.load %arg1[%c0, %c0_0] : memref<8x100xf32, #tpu.memory_space<vmem>>, vector<8x100xf32>
    %1 = arith.truncf %0 : vector<8x100xf32> to vector<8x100xbf16>
    %c0_1 = arith.constant 0 : index
    %c0_2 = arith.constant 0 : index
    %2 = vector.load %arg2[%c0_1, %c0_2] : memref<100x128xbf16, #tpu.memory_space<vmem>>, vector<100x128xbf16>
    %cst = arith.constant dense<0.000000e+00> : vector<8x128xf32>
    %3 = tpu.matmul %1, %2, %cst {dimension_numbers = #tpu.dot_dimension_numbers<[1], [0], [0], [1], [0, 0, 1, 1], [], []>} : vector<8x100xbf16>, vector<100x128xbf16>, vector<8x128xf32> -> vector<8x128xf32>
    %c0_3 = arith.constant 0 : index
    %c0_4 = arith.constant 0 : index
    %4 = vector.load %arg3[%c0_3, %c0_4] : memref<1x128xf32, #tpu.memory_space<vmem>>, vector<1x128xf32>
    %5 = vector.broadcast %4 : vector<1x128xf32> to vector<8x128xf32>
    %6 = arith.addf %3, %5 : vector<8x128xf32>
    %cst_5 = arith.constant 0.000000e+00 : f32
    %7 = vector.broadcast %cst_5 : f32 to vector<8x128xf32>
    %8 = arith.maximumf %6, %7 : vector<8x128xf32>
    %9 = arith.truncf %8 : vector<8x128xf32> to vector<8x128xbf16>
    %c0_6 = arith.constant 0 : index
    %c0_7 = arith.constant 0 : index
    %10 = vector.load %arg4[%c0_6, %c0_7] : memref<128x128xbf16, #tpu.memory_space<vmem>>, vector<128x128xbf16>
    %cst_8 = arith.constant dense<0.000000e+00> : vector<8x128xf32>
    %11 = tpu.matmul %9, %10, %cst_8 {dimension_numbers = #tpu.dot_dimension_numbers<[1], [0], [0], [1], [0, 0, 1, 1], [], []>} : vector<8x128xbf16>, vector<128x128xbf16>, vector<8x128xf32> -> vector<8x128xf32>
    %c0_9 = arith.constant 0 : index
    %c0_10 = arith.constant 0 : index
    %12 = vector.load %arg5[%c0_9, %c0_10] : memref<1x128xf32, #tpu.memory_space<vmem>>, vector<1x128xf32>
    %13 = vector.broadcast %12 : vector<1x128xf32> to vector<8x128xf32>
    %14 = arith.addf %11, %13 : vector<8x128xf32>
    %cst_11 = arith.constant 0.000000e+00 : f32
    %15 = vector.broadcast %cst_11 : f32 to vector<8x128xf32>
    %16 = arith.maximumf %14, %15 : vector<8x128xf32>
    %c0_12 = arith.constant 0 : index
    %c0_13 = arith.constant 0 : index
    %17 = vector.load %arg9[%c0_12, %c0_13] : memref<8x128xf32, #tpu.memory_space<vmem>>, vector<8x128xf32>
    tpu.vector_store %arg9[%c0_12, %c0_13], %16 {strides = array<i32>} : memref<8x128xf32, #tpu.memory_space<vmem>>, vector<8x128xf32>,
    %18 = arith.truncf %16 : vector<8x128xf32> to vector<8x128xbf16>
    %c0_14 = arith.constant 0 : index
    %c0_15 = arith.constant 0 : index
    %19 = vector.load %arg6[%c0_14, %c0_15] : memref<128x3xbf16, #tpu.memory_space<vmem>>, vector<128x3xbf16>
    %cst_16 = arith.constant dense<0.000000e+00> : vector<8x3xf32>
    %20 = tpu.matmul %18, %19, %cst_16 {dimension_numbers = #tpu.dot_dimension_numbers<[1], [0], [0], [1], [0, 0, 1, 1], [], []>} : vector<8x128xbf16>, vector<128x3xbf16>, vector<8x3xf32> -> vector<8x3xf32>
    %c0_17 = arith.constant 0 : index
    %c0_18 = arith.constant 0 : index
    %21 = vector.load %arg7[%c0_17, %c0_18] : memref<1x3xf32, #tpu.memory_space<vmem>>, vector<1x3xf32>
    %22 = vector.broadcast %21 : vector<1x3xf32> to vector<8x3xf32>
    %23 = arith.addf %20, %22 : vector<8x3xf32>
    %c0_19 = arith.constant 0 : index
    %c0_20 = arith.constant 0 : index
    %24 = vector.load %arg8[%c0_19, %c0_20] : memref<8x3xf32, #tpu.memory_space<vmem>>, vector<8x3xf32>
    tpu.vector_store %arg8[%c0_19, %c0_20], %23 {strides = array<i32>} : memref<8x3xf32, #tpu.memory_space<vmem>>, vector<8x3xf32>,
    return
  }
  func.func @transform_0(%arg0: i32) -> (i32, i32) {
    %c0_i32 = arith.constant 0 : i32
    %c0_i32_0 = arith.constant 0 : i32
    return %arg0, %c0_i32 : i32, i32
  }
  func.func @transform_1(%arg0: i32) -> (i32, i32) {
    %c0_i32 = arith.constant 0 : i32
    %c0_i32_0 = arith.constant 0 : i32
    %c0_i32_1 = arith.constant 0 : i32
    return %c0_i32, %c0_i32_0 : i32, i32
  }
  func.func @transform_2(%arg0: i32) -> (i32, i32) {
    %c0_i32 = arith.constant 0 : i32
    %c0_i32_0 = arith.constant 0 : i32
    %c0_i32_1 = arith.constant 0 : i32
    return %c0_i32, %c0_i32_0 : i32, i32
  }
  func.func @transform_3(%arg0: i32) -> (i32, i32) {
    %c0_i32 = arith.constant 0 : i32
    %c0_i32_0 = arith.constant 0 : i32
    %c0_i32_1 = arith.constant 0 : i32
    return %c0_i32, %c0_i32_0 : i32, i32
  }
  func.func @transform_4(%arg0: i32) -> (i32, i32) {
    %c0_i32 = arith.constant 0 : i32
    %c0_i32_0 = arith.constant 0 : i32
    %c0_i32_1 = arith.constant 0 : i32
    return %c0_i32, %c0_i32_0 : i32, i32
  }
  func.func @transform_5(%arg0: i32) -> (i32, i32) {
    %c0_i32 = arith.constant 0 : i32
    %c0_i32_0 = arith.constant 0 : i32
    %c0_i32_1 = arith.constant 0 : i32
    return %c0_i32, %c0_i32_0 : i32, i32
  }
  func.func @transform_6(%arg0: i32) -> (i32, i32) {
    %c0_i32 = arith.constant 0 : i32
    %c0_i32_0 = arith.constant 0 : i32
    %c0_i32_1 = arith.constant 0 : i32
    return %c0_i32, %c0_i32_0 : i32, i32
  }
  func.func @transform_7(%arg0: i32) -> (i32, i32) {
    %c0_i32 = arith.constant 0 : i32
    %c0_i32_0 = arith.constant 0 : i32
    return %arg0, %c0_i32 : i32, i32
  }
  func.func @transform_8(%arg0: i32) -> (i32, i32) {
    %c0_i32 = arith.constant 0 : i32
    %c0_i32_0 = arith.constant 0 : i32
    return %arg0, %c0_i32 : i32, i32
  }
}

</mosaic_0001>

<llo_original>
// kernel: tpu_custom_call.1
$region0: #{tpu_custom_call.1}
  #allocation0 [shape = 'u32[]', space=smem, size = 0x4, offset = 0x4, fixed_abs, tag = 'smem constant byte address 0x4 - core index']
  #allocation1 [shape = 'u32[144,128]{1,0:T(1,128)}', space=vmem, size = 0x12000, scoped, tag = 'internal scratch']
  %s0 = inlined_call_operand.vmem [shape: f32[8,100], index: 0, kind: input, shape index: {}]
  %s1 = inlined_call_operand.hbm [shape: bf16[100,128], index: 1, kind: input, shape index: {}]
  %s2 = inlined_call_operand.vmem [shape: f32[1,128], index: 2, kind: input, shape index: {}]
  %s3 = inlined_call_operand.vmem [shape: bf16[128,128], index: 3, kind: input, shape index: {}]
  %s4 = inlined_call_operand.vmem [shape: f32[1,128], index: 4, kind: input, shape index: {}]
  %s5 = inlined_call_operand.vmem [shape: bf16[128,3], index: 5, kind: input, shape index: {}]
  %s6 = inlined_call_operand.vmem [shape: f32[1,3], index: 6, kind: input, shape index: {}]
  %s7 = inlined_call_operand.vmem [shape: f32[8,3], index: 7, kind: output, shape index: {0}]
  %s8 = inlined_call_operand.hbm [shape: f32[8,128], index: 8, kind: output, shape index: {1}]
  %9 = xla_tuple %s7, %s8
  %s10 = sld [smem:[#allocation0]]
  $region50: #{tpu_custom_call.1} parent=0
    _
  %s12 = ssub.s32 1, %s10
  %s13 = scalar_select 0, %s12, %s10
  $region1: #{tpu_custom_call.1} parent=0
    #allocation2 [shape = 'u8[26624]{0}', space=vmem, size = 0x6800, scoped, tag = 'input window, operand 1, single buffered']
    #allocation3 [shape = 's32[1]{0}', space=sflag, size = 0x4, scoped, tag = 'scoped memory for tpu_custom_call.1']
    #allocation4 [shape = 's32[1]{0}', space=sflag, size = 0x4, scoped, tag = 'scoped memory for tpu_custom_call.1']
    #allocation5 [shape = 'u8[4096]{0}', space=vmem, size = 0x1000, scoped, tag = 'output window, operand 1, single buffered']
    %14 = vsyncpa [#allocation3], 0
    %15 = vsyncpa [#allocation4], 0
    // Predicated region
    $region2: #{tpu_custom_call.1} parent=1 // pred_check
      _
    $region3: #{tpu_custom_call.1} parent=1 // pred_check_branch
      %17 = sbr.rel (0) target = $region5
    $region4: #{tpu_custom_call.1} parent=1 // pred_region
      _
    $region5: #{tpu_custom_call.1} parent=1 // pred_fallthru
      _
    // Predicated region
    $region6: #{tpu_custom_call.1} parent=1 // pred_check
      _
    $region7: #{tpu_custom_call.1} parent=1 // pred_check_branch
      %19 = sbr.rel (0) target = $region9
    $region8: #{tpu_custom_call.1} parent=1 // pred_region
      %s21 = ssub.s32 832, 832
      %22 = vsyncadd [#allocation3], %s21
      %s23 = sshll.u32 [#allocation2], 4
      %s24 = int_to_ptr.vmem [resolvable:$true] %s23
      %29 = dma.hbm_to_vmem [thread:$0]  %s1, 832, %s24, [#allocation3], 64, 64, 4
    $region9: #{tpu_custom_call.1} parent=1 // pred_fallthru
      _
    // Predicated region
    $region10: #{tpu_custom_call.1} parent=1 // pred_check
      _
    $region11: #{tpu_custom_call.1} parent=1 // pred_check_branch
      %31 = sbr.rel (0) target = $region13
    $region12: #{tpu_custom_call.1} parent=1 // pred_region
      _
    $region13: #{tpu_custom_call.1} parent=1 // pred_fallthru
      _
    // Predicated region
    $region14: #{tpu_custom_call.1} parent=1 // pred_check
      _
    $region15: #{tpu_custom_call.1} parent=1 // pred_check_branch
      %33 = sbr.rel (0) target = $region17
    $region16: #{tpu_custom_call.1} parent=1 // pred_region
      _
    $region17: #{tpu_custom_call.1} parent=1 // pred_fallthru
      _
    // Predicated region
    $region18: #{tpu_custom_call.1} parent=1 // pred_check
      _
    $region19: #{tpu_custom_call.1} parent=1 // pred_check_branch
      %35 = sbr.rel (0) target = $region21
    $region20: #{tpu_custom_call.1} parent=1 // pred_region
      _
    $region21: #{tpu_custom_call.1} parent=1 // pred_fallthru
      _
    // Predicated region
    $region22: #{tpu_custom_call.1} parent=1 // pred_check
      _
    $region23: #{tpu_custom_call.1} parent=1 // pred_check_branch
      %37 = sbr.rel (0) target = $region25
    $region24: #{tpu_custom_call.1} parent=1 // pred_region
      _
    $region25: #{tpu_custom_call.1} parent=1 // pred_fallthru
      _
    // Predicated region
    $region26: #{tpu_custom_call.1} parent=1 // pred_check
      _
    $region27: #{tpu_custom_call.1} parent=1 // pred_check_branch
      %39 = sbr.rel (0) target = $region29
    $region28: #{tpu_custom_call.1} parent=1 // pred_region
      _
    $region29: #{tpu_custom_call.1} parent=1 // pred_fallthru
      _
    // Predicated region
    $region30: #{tpu_custom_call.1} parent=1 // pred_check
      _
    $region31: #{tpu_custom_call.1} parent=1 // pred_check_branch
      %41 = sbr.rel (0) target = $region33
    $region32: #{tpu_custom_call.1} parent=1 // pred_region
      %42 = dma.done [#allocation3], 832
    $region33: #{tpu_custom_call.1} parent=1 // pred_fallthru
      _
    %v44 = vld [vmem:[%s0] sm:$0xff]
    %v45 = vpack.c.bf16 %v44, %v44
    %v46 = vld [vmem:[#allocation2] sm:$0xf]
    %v47 = vld [vmem:[#allocation2 + $0x4] sm:$0xf]
    %v48 = vld [vmem:[#allocation2 + $0x8] sm:$0xf]
    %v49 = vld [vmem:[#allocation2 + $0xc] sm:$0xf]
    %v50 = vld [vmem:[#allocation2 + $0x10] sm:$0xf]
    %v51 = vld [vmem:[#allocation2 + $0x14] sm:$0xf]
    %v52 = vld [vmem:[#allocation2 + $0x18] sm:$0xf]
    %v53 = vld [vmem:[#allocation2 + $0x1c] sm:$0xf]
    %v54 = vld [vmem:[#allocation2 + $0x20] sm:$0xf]
    %v55 = vld [vmem:[#allocation2 + $0x24] sm:$0xf]
    %v56 = vld [vmem:[#allocation2 + $0x28] sm:$0xf]
    %v57 = vld [vmem:[#allocation2 + $0x2c] sm:$0xf]
    %v58 = vld [vmem:[#allocation2 + $0x30] sm:$0x3]
    %v59 = vld [vmem:[%s2] sm:$0x1]
    %v61 = vlaneseq
    %v62 = vshrl.u32 %v61, 7
    %v63 = vsub.s32 0, %v62
    %v64 = vrot.slane %v59, %v63
    %v79 = vunpack.c.l.b16 %v46
    %v80 = vunpack.c.l.b16 %v47
    %v81 = vunpack.c.l.b16 %v48
    %v82 = vunpack.c.l.b16 %v49
    %v83 = vunpack.c.l.b16 %v50
    %v84 = vunpack.c.l.b16 %v51
    %v85 = vunpack.c.l.b16 %v52
    %v86 = vunpack.c.l.b16 %v53
    %v87 = vunpack.c.l.b16 %v54
    %v88 = vunpack.c.l.b16 %v55
    %v89 = vunpack.c.l.b16 %v56
    %v90 = vunpack.c.l.b16 %v57
    %v91 = vunpack.c.l.b16 %v58
    %v92 = vpack.c.b16 %v80, %v79
    %v93 = vpack.c.b16 %v82, %v81
    %v94 = vpack.c.b16 %v84, %v83
    %v95 = vpack.c.b16 %v86, %v85
    %v96 = vpack.c.b16 %v88, %v87
    %v97 = vpack.c.b16 %v90, %v89
    %v98 = vpack.c.b16 %v91, %v91
    %vm105 = vcmask 818176
    %v107 = vsel %vm105, %v45, 0
    %vm109 = vcmask 1041408
    %v111 = vsel %vm109, %v98, 0
    %113 = vmatprep.subr.bf16.mxu0 0
    %114 = vmatpush1.bf16.msra.mxu0 %v92
    %115 = vmatprep.subr.bf16.mxu0 0
    %116 = vmatpush1.bf16.msra.mxu0 %v93
    %117 = vmatprep.subr.bf16.mxu0 0
    %118 = vmatpush1.bf16.msra.mxu0 %v94
    %119 = vmatprep.subr.bf16.mxu0 0
    %120 = vmatpush1.bf16.msra.mxu0 %v95
    %121 = vmatprep.subr.bf16.mxu0 0
    %122 = vmatpush1.bf16.msra.mxu0 %v96
    %123 = vmatprep.subr.bf16.mxu0 0
    %124 = vmatpush1.bf16.msra.mxu0 %v97
    %125 = vmatprep.subr.bf16.mxu0 0
    %126 = vmatpush1.bf16.msra.mxu0 %v111
    %127 = vmatprep.subr.bf16.mxu0 0
    %128 = vmatpush1.bf16.msra.mxu0 0
    %129 = vmatprep.subr.bf16.mxu0 0
    %130 = vmatpush1.bf16.msra.mxu0 0
    %131 = vmatprep.subr.bf16.mxu0 0
    %132 = vmatpush1.bf16.msra.mxu0 0
    %133 = vmatprep.subr.bf16.mxu0 0
    %134 = vmatpush1.bf16.msra.mxu0 0
    %135 = vmatprep.subr.bf16.mxu0 0
    %136 = vmatpush1.bf16.msra.mxu0 0
    %137 = vmatprep.subr.bf16.mxu0 0
    %138 = vmatpush1.bf16.msra.mxu0 0
    %139 = vmatprep.subr.bf16.mxu0 0
    %140 = vmatpush1.bf16.msra.mxu0 0
    %141 = vmatprep.subr.bf16.mxu0 0
    %142 = vmatpush1.bf16.msra.mxu0 0
    %143 = vmatprep.subr.bf16.mxu0 0
    %144 = vmatpush1.bf16.msra.mxu0 0
    %145 = vmatprep.mubr.bf16.mxu0 0
    %146 = vmatmul.mubr.bf16.gmra.mrb[0].mxu0 %v107
    %v147 = vpop.f32.mrb[0].mxu0
    %v148 = vadd.f32 %v64, %v147
    %v149 = vpop.f32.mrb[0].mxu0
    %v150 = vpop.f32.mrb[0].mxu0
    %v151 = vpop.f32.mrb[0].mxu0
    %152 = vdwg.mxu0
    %v153 = vmax.f32 %v148, 0.0
    %v154 = vpack.c.bf16 %v153, %v153
    %v155 = vld [vmem:[%s3] sm:$0xf]
    %v156 = vld [vmem:[%s3 + $0x4] sm:$0xf]
    %v157 = vld [vmem:[%s3 + $0x8] sm:$0xf]
    %v158 = vld [vmem:[%s3 + $0xc] sm:$0xf]
    %v159 = vld [vmem:[%s3 + $0x10] sm:$0xf]
    %v160 = vld [vmem:[%s3 + $0x14] sm:$0xf]
    %v161 = vld [vmem:[%s3 + $0x18] sm:$0xf]
    %v162 = vld [vmem:[%s3 + $0x1c] sm:$0xf]
    %v163 = vld [vmem:[%s3 + $0x20] sm:$0xf]
    %v164 = vld [vmem:[%s3 + $0x24] sm:$0xf]
    %v165 = vld [vmem:[%s3 + $0x28] sm:$0xf]
    %v166 = vld [vmem:[%s3 + $0x2c] sm:$0xf]
    %v167 = vld [vmem:[%s3 + $0x30] sm:$0xf]
    %v168 = vld [vmem:[%s3 + $0x34] sm:$0xf]
    %v169 = vld [vmem:[%s3 + $0x38] sm:$0xf]
    %v170 = vld [vmem:[%s3 + $0x3c] sm:$0xf]
    %v171 = vld [vmem:[%s4] sm:$0x1]
    %v173 = vlaneseq
    %v174 = vshrl.u32 %v173, 7
    %v175 = vsub.s32 0, %v174
    %v176 = vrot.slane %v171, %v175
    %v194 = vunpack.c.l.b16 %v155
    %v195 = vunpack.c.l.b16 %v156
    %v196 = vunpack.c.l.b16 %v157
    %v197 = vunpack.c.l.b16 %v158
    %v198 = vunpack.c.l.b16 %v159
    %v199 = vunpack.c.l.b16 %v160
    %v200 = vunpack.c.l.b16 %v161
    %v201 = vunpack.c.l.b16 %v162
    %v202 = vunpack.c.l.b16 %v163
    %v203 = vunpack.c.l.b16 %v164
    %v204 = vunpack.c.l.b16 %v165
    %v205 = vunpack.c.l.b16 %v166
    %v206 = vunpack.c.l.b16 %v167
    %v207 = vunpack.c.l.b16 %v168
    %v208 = vunpack.c.l.b16 %v169
    %v209 = vunpack.c.l.b16 %v170
    %v210 = vpack.c.b16 %v195, %v194
    %v211 = vpack.c.b16 %v197, %v196
    %v212 = vpack.c.b16 %v199, %v198
    %v213 = vpack.c.b16 %v201, %v200
    %v214 = vpack.c.b16 %v203, %v202
    %v215 = vpack.c.b16 %v205, %v204
    %v216 = vpack.c.b16 %v207, %v206
    %v217 = vpack.c.b16 %v209, %v208
    %226 = vmatprep.subr.bf16.mxu0 0
    %227 = vmatpush1.bf16.msra.mxu0 %v210
    %228 = vmatprep.subr.bf16.mxu0 0
    %229 = vmatpush1.bf16.msra.mxu0 %v211
    %230 = vmatprep.subr.bf16.mxu0 0
    %231 = vmatpush1.bf16.msra.mxu0 %v212
    %232 = vmatprep.subr.bf16.mxu0 0
    %233 = vmatpush1.bf16.msra.mxu0 %v213
    %234 = vmatprep.subr.bf16.mxu0 0
    %235 = vmatpush1.bf16.msra.mxu0 %v214
    %236 = vmatprep.subr.bf16.mxu0 0
    %237 = vmatpush1.bf16.msra.mxu0 %v215
    %238 = vmatprep.subr.bf16.mxu0 0
    %239 = vmatpush1.bf16.msra.mxu0 %v216
    %240 = vmatprep.subr.bf16.mxu0 0
    %241 = vmatpush1.bf16.msra.mxu0 %v217
    %242 = vmatprep.subr.bf16.mxu0 0
    %243 = vmatpush1.bf16.msra.mxu0 0
    %244 = vmatprep.subr.bf16.mxu0 0
    %245 = vmatpush1.bf16.msra.mxu0 0
    %246 = vmatprep.subr.bf16.mxu0 0
    %247 = vmatpush1.bf16.msra.mxu0 0
    %248 = vmatprep.subr.bf16.mxu0 0
    %249 = vmatpush1.bf16.msra.mxu0 0
    %250 = vmatprep.subr.bf16.mxu0 0
    %251 = vmatpush1.bf16.msra.mxu0 0
    %252 = vmatprep.subr.bf16.mxu0 0
    %253 = vmatpush1.bf16.msra.mxu0 0
    %254 = vmatprep.subr.bf16.mxu0 0
    %255 = vmatpush1.bf16.msra.mxu0 0
    %256 = vmatprep.subr.bf16.mxu0 0
    %257 = vmatpush1.bf16.msra.mxu0 0
    %258 = vmatprep.mubr.bf16.mxu0 0
    %259 = vmatmul.mubr.bf16.gmra.mrb[0].mxu0 %v154
    %v260 = vpop.f32.mrb[0].mxu0
    %v261 = vadd.f32 %v176, %v260
    %v262 = vpop.f32.mrb[0].mxu0
    %v263 = vpop.f32.mrb[0].mxu0
    %v264 = vpop.f32.mrb[0].mxu0
    %265 = vdwg.mxu0
    %v266 = vmax.f32 %v261, 0.0
    %267 = vst [vmem:[#allocation5] sm:$0xff] %v266
    %v268 = vpack.c.bf16 %v266, %v266
    %v269 = vld [vmem:[%s5] sm:$0xf]
    %v270 = vld [vmem:[%s5 + $0x4] sm:$0xf]
    %v271 = vld [vmem:[%s5 + $0x8] sm:$0xf]
    %v272 = vld [vmem:[%s5 + $0xc] sm:$0xf]
    %v273 = vld [vmem:[%s5 + $0x10] sm:$0xf]
    %v274 = vld [vmem:[%s5 + $0x14] sm:$0xf]
    %v275 = vld [vmem:[%s5 + $0x18] sm:$0xf]
    %v276 = vld [vmem:[%s5 + $0x1c] sm:$0xf]
    %v277 = vld [vmem:[%s5 + $0x20] sm:$0xf]
    %v278 = vld [vmem:[%s5 + $0x24] sm:$0xf]
    %v279 = vld [vmem:[%s5 + $0x28] sm:$0xf]
    %v280 = vld [vmem:[%s5 + $0x2c] sm:$0xf]
    %v281 = vld [vmem:[%s5 + $0x30] sm:$0xf]
    %v282 = vld [vmem:[%s5 + $0x34] sm:$0xf]
    %v283 = vld [vmem:[%s5 + $0x38] sm:$0xf]
    %v284 = vld [vmem:[%s5 + $0x3c] sm:$0xf]
    %v285 = vld [vmem:[%s6] sm:$0x1]
    %v287 = vlaneseq
    %v288 = vshrl.u32 %v287, 7
    %v289 = vsub.s32 0, %v288
    %v290 = vrot.slane %v285, %v289
    %v308 = vunpack.c.l.b16 %v269
    %v309 = vunpack.c.l.b16 %v270
    %v310 = vunpack.c.l.b16 %v271
    %v311 = vunpack.c.l.b16 %v272
    %v312 = vunpack.c.l.b16 %v273
    %v313 = vunpack.c.l.b16 %v274
    %v314 = vunpack.c.l.b16 %v275
    %v315 = vunpack.c.l.b16 %v276
    %v316 = vunpack.c.l.b16 %v277
    %v317 = vunpack.c.l.b16 %v278
    %v318 = vunpack.c.l.b16 %v279
    %v319 = vunpack.c.l.b16 %v280
    %v320 = vunpack.c.l.b16 %v281
    %v321 = vunpack.c.l.b16 %v282
    %v322 = vunpack.c.l.b16 %v283
    %v323 = vunpack.c.l.b16 %v284
    %v324 = vpack.c.b16 %v309, %v308
    %v325 = vpack.c.b16 %v311, %v310
    %v326 = vpack.c.b16 %v313, %v312
    %v327 = vpack.c.b16 %v315, %v314
    %v328 = vpack.c.b16 %v317, %v316
    %v329 = vpack.c.b16 %v319, %v318
    %v330 = vpack.c.b16 %v321, %v320
    %v331 = vpack.c.b16 %v323, %v322
    %340 = vmatprep.subr.bf16.mxu0 0
    %341 = vmatpush1.bf16.msra.mxu0 %v324
    %342 = vmatprep.subr.bf16.mxu0 0
    %343 = vmatpush1.bf16.msra.mxu0 %v325
    %344 = vmatprep.subr.bf16.mxu0 0
    %345 = vmatpush1.bf16.msra.mxu0 %v326
    %346 = vmatprep.subr.bf16.mxu0 0
    %347 = vmatpush1.bf16.msra.mxu0 %v327
    %348 = vmatprep.subr.bf16.mxu0 0
    %349 = vmatpush1.bf16.msra.mxu0 %v328
    %350 = vmatprep.subr.bf16.mxu0 0
    %351 = vmatpush1.bf16.msra.mxu0 %v329
    %352 = vmatprep.subr.bf16.mxu0 0
    %353 = vmatpush1.bf16.msra.mxu0 %v330
    %354 = vmatprep.subr.bf16.mxu0 0
    %355 = vmatpush1.bf16.msra.mxu0 %v331
    %356 = vmatprep.subr.bf16.mxu0 0
    %357 = vmatpush1.bf16.msra.mxu0 0
    %358 = vmatprep.subr.bf16.mxu0 0
    %359 = vmatpush1.bf16.msra.mxu0 0
    %360 = vmatprep.subr.bf16.mxu0 0
    %361 = vmatpush1.bf16.msra.mxu0 0
    %362 = vmatprep.subr.bf16.mxu0 0
    %363 = vmatpush1.bf16.msra.mxu0 0
    %364 = vmatprep.subr.bf16.mxu0 0
    %365 = vmatpush1.bf16.msra.mxu0 0
    %366 = vmatprep.subr.bf16.mxu0 0
    %367 = vmatpush1.bf16.msra.mxu0 0
    %368 = vmatprep.subr.bf16.mxu0 0
    %369 = vmatpush1.bf16.msra.mxu0 0
    %370 = vmatprep.subr.bf16.mxu0 0
    %371 = vmatpush1.bf16.msra.mxu0 0
    %372 = vmatprep.mubr.bf16.mxu0 0
    %373 = vmatmul.mubr.bf16.gmra.mrb[0].mxu0 %v268
    %v374 = vpop.f32.mrb[0].mxu0
    %v375 = vadd.f32 %v290, %v374
    %v376 = vpop.f32.mrb[0].mxu0
    %v377 = vpop.f32.mrb[0].mxu0
    %v378 = vpop.f32.mrb[0].mxu0
    %379 = vdwg.mxu0
    %vm380 = vcmask 23552
    %381 = vst.msk [vmem:[%s7] sm:$0xff] %vm380, %v375
    // Predicated region
    $region34: #{tpu_custom_call.1} parent=1 // pred_check
      _
    $region35: #{tpu_custom_call.1} parent=1 // pred_check_branch
      %383 = sbr.rel (0) target = $region37
    $region36: #{tpu_custom_call.1} parent=1 // pred_region
      _
    $region37: #{tpu_custom_call.1} parent=1 // pred_fallthru
      _
    // Predicated region
    $region38: #{tpu_custom_call.1} parent=1 // pred_check
      _
    $region39: #{tpu_custom_call.1} parent=1 // pred_check_branch
      %385 = sbr.rel (0) target = $region41
    $region40: #{tpu_custom_call.1} parent=1 // pred_region
      %s387 = ssub.s32 128, 128
      %388 = vsyncadd [#allocation4], %s387
      %s390 = sshll.u32 [#allocation5], 4
      %s391 = int_to_ptr.vmem [resolvable:$true] %s390
      %393 = dma.vmem_to_hbm [thread:$0]  %s391, 128, %s8, [#allocation4]
    $region41: #{tpu_custom_call.1} parent=1 // pred_fallthru
      _
    // Predicated region
    $region42: #{tpu_custom_call.1} parent=1 // pred_check
      _
    $region43: #{tpu_custom_call.1} parent=1 // pred_check_branch
      %395 = sbr.rel (0) target = $region45
    $region44: #{tpu_custom_call.1} parent=1 // pred_region
      _
    $region45: #{tpu_custom_call.1} parent=1 // pred_fallthru
      _
    // Predicated region
    $region46: #{tpu_custom_call.1} parent=1 // pred_check
      _
    $region47: #{tpu_custom_call.1} parent=1 // pred_check_branch
      %397 = sbr.rel (0) target = $region49
    $region48: #{tpu_custom_call.1} parent=1 // pred_region
      %398 = dma.done [#allocation4], 128
    $region49: #{tpu_custom_call.1} parent=1 // pred_fallthru
      _
    %399 = vsyncpa [#allocation3], 1
    %400 = vsyncpa [#allocation4], 1

</llo_original>
